<compile_context>
chip_gen: v7x
topology: tpu7x:2x2x1
jax: 0.10.0
libtpu: 0.0.40
codegen_flags: <defaults>
</compile_context>

<pallas_src>
import jax
import jax.numpy as jnp
from jax.experimental import pallas as pl
from jax.experimental.pallas import tpu as pltpu


# ---------------------------------------------------------------------------
# Kernel
# ---------------------------------------------------------------------------
def _compl_mul_kernel(x_ref, w_ref, o_ref):
    """Complex contraction over Cin for one (mode_tile, Cout_tile, B_tile) cell.

    x_ref: (2, Cin, TB,  TM)   [real/imag, in-channels, batch tile, mode tile]
    w_ref: (2, Cin, TCO, TM)   [real/imag, in-channels, out-channel tile, mode tile]
    o_ref: (2, TB,  TCO, TM)
    """
    cin = x_ref.shape[1]
    tb = x_ref.shape[2]
    tco = w_ref.shape[2]
    tm = x_ref.shape[3]

    def step(c, acc_r, acc_i):
        # Full contiguous (TB, TM) / (TCO, TM) tile loads per Cin step.
        xr = x_ref[0, c][:, None, :]   # (TB, 1, TM)
        xi = x_ref[1, c][:, None, :]
        wr = w_ref[0, c][None, :, :]   # (1, TCO, TM)
        wi = w_ref[1, c][None, :, :]
        # (a + ib)(c + id) = (ac - bd) + i(ad + bc)
        # TODO(synk): v5e VALU micro-opt - 3-multiply (Karatsuba) form with a
        # precomputed third weight plane; skipped to keep weight bytes low on v7x.
        acc_r = acc_r + (xr * wr - xi * wi)
        acc_i = acc_i + (xr * wi + xi * wr)
        return acc_r, acc_i

    acc_r = jnp.zeros((tb, tco, tm), jnp.float32)
    acc_i = jnp.zeros((tb, tco, tm), jnp.float32)

    # TODO(synk): for Cin/Cout >= ~128 (fills the MXU) this contraction should
    # switch to a per-mode batched lax.dot_general ((TB,Cin)x(Cin,TCO), 3-4 real
    # matmuls for the complex product); the VPU path is right for the small
    # channel counts exercised here.
    if cin <= 16:
        # Small static Cin: full unroll keeps the loop visible to the scheduler.
        for c in range(cin):
            acc_r, acc_i = step(c, acc_r, acc_i)
    else:
        # Large Cin: bound live ranges instead of fully unrolling.
        def body(c, carry):
            return step(c, *carry)
        acc_r, acc_i = jax.lax.fori_loop(0, cin, body, (acc_r, acc_i), unroll=4)

    # Each output tile is written exactly once, lane-dense (TM is a multiple of 128).
    o_ref[0] = acc_r
    o_ref[1] = acc_i


# ---------------------------------------------------------------------------
# Tiling helpers
# ---------------------------------------------------------------------------
def _pick_tile(n, cap):
    """Largest t dividing n with t <= cap and (t % 8 == 0 or t == n).

    Falls back to the smallest 8-aligned divisor (or the full dim) so the
    (8,128) rule on the last-two block dims is never violated.
    """
    cap = max(1, min(n, cap))
    for t in range(cap, 0, -1):
        if n % t == 0 and (t == n or t % 8 == 0):
            return t
    for t in range(8, n, 8):
        if n % t == 0:
            return t
    return n


def _pick_mode_tile(mp, cap):
    """Largest multiple of 128 that divides mp (mp is already a multiple of 128)."""
    q = mp // 128
    best = 1
    for d in range(1, q + 1):
        if q % d == 0 and d * 128 <= cap:
            best = d
    return best * 128


def _chip_vmem_budget():
    """(per-input-block byte cap, max vmem_limit_bytes) - chip aware."""
    try:
        cap = pltpu.get_tpu_info().vmem_capacity_bytes
    except Exception:  # pragma: no cover - info query unavailable
        cap = None
    if cap is not None and cap <= (64 << 20):      # v7x-class: 64 MiB per TC
        return (5 << 19), (48 << 20)               # 2.5 MiB blocks, <=48 MiB request
    if cap is not None and cap >= (128 << 20):     # v5e / v6e: 128 MiB per TC
        return (6 << 20), (96 << 20)
    return (4 << 20), (48 << 20)                   # unknown -> conservative


# ---------------------------------------------------------------------------
# pallas_call wrapper
# ---------------------------------------------------------------------------
def _pallas_compl_mul(x_pack, w_pack):
    """x_pack: f32 (2, Cin, B, Mp); w_pack: f32 (2, Cin, Cout, Mp)
    -> f32 (2, B, Cout, Mp)  (axis 0 = real/imag)."""
    _, Cin, B, Mp = x_pack.shape
    Cout = w_pack.shape[2]

    blk_cap, vmem_cap = _chip_vmem_budget()

    # Both f32 accumulators (tb, tco, tmp) together capped at ~128 KiB so they
    # stay (mostly) vreg-resident instead of spilling to VMEM.
    ACC_ELEMS = (128 << 10) // 8
    tb_floor = B if B < 8 else 8
    tco_floor = Cout if Cout < 8 else 8

    tmp_cap = max(128, ACC_ELEMS // max(1, tb_floor * tco_floor))
    tmp = _pick_mode_tile(Mp, min(tmp_cap, 1024))

    row_bytes = 2 * Cin * tmp * 4  # real+imag f32 per (channel, mode-tile) row
    tco_cap = min(max(1, ACC_ELEMS // (tmp * tb_floor)),
                  max(1, blk_cap // row_bytes))
    tco = _pick_tile(Cout, tco_cap)

    tb_cap = min(max(1, ACC_ELEMS // (tmp * tco)),
                 max(1, blk_cap // row_bytes))
    tb = _pick_tile(B, tb_cap)

    grid = (Mp // tmp, Cout // tco, B // tb)

    x_blk = 2 * Cin * tb * tmp * 4
    w_blk = 2 * Cin * tco * tmp * 4
    o_blk = 2 * tb * tco * tmp * 4
    need = 2 * (x_blk + w_blk + o_blk)  # double-buffered in/out blocks
    vmem_limit = None if need <= (16 << 20) else min(need + (8 << 20), vmem_cap)

    cost = pl.CostEstimate(
        flops=8 * B * Cin * Cout * Mp,
        transcendentals=0,
        bytes_accessed=(x_pack.size + w_pack.size + 2 * B * Cout * Mp) * 4,
    )

    return pl.pallas_call(
        _compl_mul_kernel,
        grid=grid,
        in_specs=[
            # x block depends on (m, b) only.
            pl.BlockSpec((2, Cin, tb, tmp), lambda m, co, b: (0, 0, b, m)),
            # Weight block ignores b (innermost grid axis) -> stays resident in
            # VMEM across the batch sweep, no re-DMA per batch tile.
            # TODO(synk): on v7x, pipeline_mode=pl.Buffered(1) here would halve
            # weight VMEM at the cost of one prefetch bubble per Cout tile.
            pl.BlockSpec((2, Cin, tco, tmp), lambda m, co, b: (0, 0, co, m)),
        ],
        out_specs=pl.BlockSpec((2, tb, tco, tmp), lambda m, co, b: (0, b, co, m)),
        out_shape=jax.ShapeDtypeStruct((2, B, Cout, Mp), jnp.float32),
        compiler_params=pltpu.CompilerParams(
            # Every output block is written exactly once (no cross-grid
            # reduction), so all axes can be sharded across TensorCores.
            dimension_semantics=("parallel", "parallel", "parallel"),
            vmem_limit_bytes=vmem_limit,
        ),
        cost_estimate=cost,
    )(x_pack, w_pack)


# ---------------------------------------------------------------------------
# Module-level forward
# ---------------------------------------------------------------------------
def prepare_spectral_weights(weights1, weights2, modes1, modes2):
    """Pack complex weights once at init: fold the two corner blocks along the
    mode axis, stack real/imag, pad modes to a multiple of 128.

    weights1/2: complex64 (Cin, Cout, modes1, modes2)
    returns:    float32 (2, Cin, Cout, Mp)  with Mp = ceil(2*m1*m2 / 128)*128
    """
    Cin, Cout = weights1.shape[:2]
    M = modes1 * modes2
    Mt = 2 * M
    Mp = ((Mt + 127) // 128) * 128
    wc = jnp.concatenate(
        [weights1.reshape(Cin, Cout, M), weights2.reshape(Cin, Cout, M)], axis=-1)
    w_pack = jnp.stack([jnp.real(wc), jnp.imag(wc)], axis=0)  # (2, Cin, Cout, 2M)
    return jnp.pad(w_pack, ((0, 0), (0, 0), (0, 0), (0, Mp - Mt)))


def spectral_conv2d_fast(x, w_pack, modes1, modes2):
    """Forward pass of SpectralConv2d_fast.

    x:       float32 (B, Cin, H, W)              [NCHW, as in PyTorch]
    w_pack:  float32 (2, Cin, Cout, Mp)           from prepare_spectral_weights
    returns: float32 (B, Cout, H, W)
    """
    B, Cin, H, W = x.shape
    Cout = w_pack.shape[2]
    Wf = W // 2 + 1
    M = modes1 * modes2
    Mt = 2 * M
    Mp = w_pack.shape[3]

    # TODO(synk): rfft2 / irfft2 have no Pallas TPU primitive; they stay in XLA.
    x_ft = jnp.fft.rfft2(x)  # (B, Cin, H, Wf) complex64

    # Fold the two corner mode blocks along the mode (lane) axis.
    x1 = x_ft[:, :, :modes1, :modes2].reshape(B, Cin, M)
    x2 = x_ft[:, :, H - modes1:, :modes2].reshape(B, Cin, M)
    xc = jnp.concatenate([x1, x2], axis=-1)                 # (B, Cin, 2M)

    # Pack real/imag, move Cin ahead of the batch tile, pad modes to Mp.
    x_pack = jnp.stack([jnp.real(xc), jnp.imag(xc)], axis=0)  # (2, B, Cin, 2M)
    x_pack = jnp.transpose(x_pack, (0, 2, 1, 3))              # (2, Cin, B, 2M)
    x_pack = jnp.pad(x_pack, ((0, 0), (0, 0), (0, 0), (0, Mp - Mt)))

    out = _pallas_compl_mul(x_pack, w_pack)                   # (2, B, Cout, Mp)
    o = jax.lax.complex(out[0], out[1])[..., :Mt]             # (B, Cout, 2M)
    o1 = o[..., :M].reshape(B, Cout, modes1, modes2)
    o2 = o[..., M:].reshape(B, Cout, modes1, modes2)

    if H >= 2 * modes1:
        # Assemble out_ft with pad + concatenate (single pass, no scatter).
        o1p = jnp.pad(o1, ((0, 0), (0, 0), (0, 0), (0, Wf - modes2)))
        o2p = jnp.pad(o2, ((0, 0), (0, 0), (0, 0), (0, Wf - modes2)))
        mid = jnp.zeros((B, Cout, H - 2 * modes1, Wf), dtype=o1p.dtype)
        out_ft = jnp.concatenate([o1p, mid, o2p], axis=2)
    else:
        # Rare overlapping-mode case: exact PyTorch write order (block2 wins).
        out_ft = jnp.zeros((B, Cout, H, Wf), dtype=jnp.complex64)
        out_ft = out_ft.at[:, :, :modes1, :modes2].set(o1)
        out_ft = out_ft.at[:, :, H - modes1:, :modes2].set(o2)

    return jnp.fft.irfft2(out_ft, s=(H, W))


# ---------------------------------------------------------------------------
# Pure-JAX reference (mirrors the PyTorch forward exactly)
# ---------------------------------------------------------------------------
def _reference(x, weights1, weights2, modes1, modes2):
    B, Cin, H, W = x.shape
    Cout = weights1.shape[1]
    Wf = W // 2 + 1
    x_ft = jnp.fft.rfft2(x)
    out_ft = jnp.zeros((B, Cout, H, Wf), dtype=jnp.complex64)
    out_ft = out_ft.at[:, :, :modes1, :modes2].set(
        jnp.einsum('bixy,ioxy->boxy', x_ft[:, :, :modes1, :modes2], weights1))
    out_ft = out_ft.at[:, :, H - modes1:, :modes2].set(
        jnp.einsum('bixy,ioxy->boxy', x_ft[:, :, H - modes1:, :modes2], weights2))
    return jnp.fft.irfft2(out_ft, s=(H, W))


if __name__ == "__main__":
    B, Cin, Cout, H, W = 2, 4, 4, 16, 16
    modes1, modes2 = 6, 6

    key = jax.random.PRNGKey(0)
    k1, k2, k3, k4, k5 = jax.random.split(key, 5)

    # Deterministic init matching nn.Parameter(scale * torch.rand(..., dtype=cfloat)):
    # uniform[0,1) real/imag, scaled by 1/(Cin*Cout).
    scale = 1.0 / (Cin * Cout)
    w1 = jax.lax.complex(
        scale * jax.random.uniform(k1, (Cin, Cout, modes1, modes2), jnp.float32),
        scale * jax.random.uniform(k2, (Cin, Cout, modes1, modes2), jnp.float32))
    w2 = jax.lax.complex(
        scale * jax.random.uniform(k3, (Cin, Cout, modes1, modes2), jnp.float32),
        scale * jax.random.uniform(k4, (Cin, Cout, modes1, modes2), jnp.float32))

    x = jax.random.normal(k5, (B, Cin, H, W), jnp.float32)

    # Pack weights ONCE (module init time), outside the jitted forward.
    w_pack = jax.block_until_ready(prepare_spectral_weights(w1, w2, modes1, modes2))

    fwd = jax.jit(spectral_conv2d_fast, static_argnums=(2, 3))
    out = jax.block_until_ready(fwd(x, w_pack, modes1, modes2))

    ref = jax.block_until_ready(_reference(x, w1, w2, modes1, modes2))
    assert out.shape == (B, Cout, H, W), out.shape
    assert out.dtype == jnp.float32, out.dtype
    assert jnp.allclose(out, ref, atol=1e-5, rtol=1e-5), "mismatch vs reference"

    print("KERNEL_OK")
</pallas_src>

<mosaic_0001>
module attributes {stable_mosaic.version = 11 : i64} {
  func.func @_compl_mul_kernel(%arg0: i32, %arg1: i32, %arg2: i32, %arg3: memref<2x4x2x128xf32, #tpu.memory_space<vmem>>, %arg4: memref<2x4x4x128xf32, #tpu.memory_space<vmem>>, %arg5: memref<2x2x4x128xf32, #tpu.memory_space<vmem>>) attributes {dimension_semantics = [#tpu.dimension_semantics<parallel>, #tpu.dimension_semantics<parallel>, #tpu.dimension_semantics<parallel>], iteration_bounds = array<i64: 1, 1, 1>, scalar_prefetch = 0 : i64, scratch_operands = 0 : i64, tpu.core_type = #tpu.core_type<tc>, window_params = [{transform_indices = @transform_0, window_bounds = array<i64: 2, 4, 2, 128>}, {transform_indices = @transform_1, window_bounds = array<i64: 2, 4, 4, 128>}, {transform_indices = @transform_2, window_bounds = array<i64: 2, 2, 4, 128>}]} {
    %cst = arith.constant 0.000000e+00 : f32
    %0 = vector.broadcast %cst : f32 to vector<2x4x128xf32>
    %cst_0 = arith.constant 0.000000e+00 : f32
    %1 = vector.broadcast %cst_0 : f32 to vector<2x4x128xf32>
    %c0 = arith.constant 0 : index
    %c0_1 = arith.constant 0 : index
    %c0_2 = arith.constant 0 : index
    %c0_3 = arith.constant 0 : index
    %2 = vector.load %arg3[%c0, %c0_1, %c0_2, %c0_3] : memref<2x4x2x128xf32, #tpu.memory_space<vmem>>, vector<1x1x2x128xf32>
    %3 = vector.shape_cast %2 : vector<1x1x2x128xf32> to vector<2x128xf32>
    %4 = vector.shape_cast %3 : vector<2x128xf32> to vector<2x1x128xf32>
    %c1 = arith.constant 1 : index
    %c0_4 = arith.constant 0 : index
    %c0_5 = arith.constant 0 : index
    %c0_6 = arith.constant 0 : index
    %5 = vector.load %arg3[%c1, %c0_4, %c0_5, %c0_6] : memref<2x4x2x128xf32, #tpu.memory_space<vmem>>, vector<1x1x2x128xf32>
    %6 = vector.shape_cast %5 : vector<1x1x2x128xf32> to vector<2x128xf32>
    %7 = vector.shape_cast %6 : vector<2x128xf32> to vector<2x1x128xf32>
    %c0_7 = arith.constant 0 : index
    %c0_8 = arith.constant 0 : index
    %c0_9 = arith.constant 0 : index
    %c0_10 = arith.constant 0 : index
    %8 = vector.load %arg4[%c0_7, %c0_8, %c0_9, %c0_10] : memref<2x4x4x128xf32, #tpu.memory_space<vmem>>, vector<1x1x4x128xf32>
    %9 = vector.shape_cast %8 : vector<1x1x4x128xf32> to vector<4x128xf32>
    %10 = vector.shape_cast %9 : vector<4x128xf32> to vector<1x4x128xf32>
    %c1_11 = arith.constant 1 : index
    %c0_12 = arith.constant 0 : index
    %c0_13 = arith.constant 0 : index
    %c0_14 = arith.constant 0 : index
    %11 = vector.load %arg4[%c1_11, %c0_12, %c0_13, %c0_14] : memref<2x4x4x128xf32, #tpu.memory_space<vmem>>, vector<1x1x4x128xf32>
    %12 = vector.shape_cast %11 : vector<1x1x4x128xf32> to vector<4x128xf32>
    %13 = vector.shape_cast %12 : vector<4x128xf32> to vector<1x4x128xf32>
    %14 = vector.broadcast %4 : vector<2x1x128xf32> to vector<2x4x128xf32>
    %15 = vector.broadcast %10 : vector<1x4x128xf32> to vector<2x4x128xf32>
    %16 = arith.mulf %14, %15 : vector<2x4x128xf32>
    %17 = vector.broadcast %7 : vector<2x1x128xf32> to vector<2x4x128xf32>
    %18 = vector.broadcast %13 : vector<1x4x128xf32> to vector<2x4x128xf32>
    %19 = arith.mulf %17, %18 : vector<2x4x128xf32>
    %20 = arith.subf %16, %19 : vector<2x4x128xf32>
    %21 = arith.addf %0, %20 : vector<2x4x128xf32>
    %22 = vector.broadcast %4 : vector<2x1x128xf32> to vector<2x4x128xf32>
    %23 = vector.broadcast %13 : vector<1x4x128xf32> to vector<2x4x128xf32>
    %24 = arith.mulf %22, %23 : vector<2x4x128xf32>
    %25 = vector.broadcast %7 : vector<2x1x128xf32> to vector<2x4x128xf32>
    %26 = vector.broadcast %10 : vector<1x4x128xf32> to vector<2x4x128xf32>
    %27 = arith.mulf %25, %26 : vector<2x4x128xf32>
    %28 = arith.addf %24, %27 : vector<2x4x128xf32>
    %29 = arith.addf %1, %28 : vector<2x4x128xf32>
    %c0_15 = arith.constant 0 : index
    %c1_16 = arith.constant 1 : index
    %c0_17 = arith.constant 0 : index
    %c0_18 = arith.constant 0 : index
    %30 = vector.load %arg3[%c0_15, %c1_16, %c0_17, %c0_18] : memref<2x4x2x128xf32, #tpu.memory_space<vmem>>, vector<1x1x2x128xf32>
    %31 = vector.shape_cast %30 : vector<1x1x2x128xf32> to vector<2x128xf32>
    %32 = vector.shape_cast %31 : vector<2x128xf32> to vector<2x1x128xf32>
    %c1_19 = arith.constant 1 : index
    %c1_20 = arith.constant 1 : index
    %c0_21 = arith.constant 0 : index
    %c0_22 = arith.constant 0 : index
    %33 = vector.load %arg3[%c1_19, %c1_20, %c0_21, %c0_22] : memref<2x4x2x128xf32, #tpu.memory_space<vmem>>, vector<1x1x2x128xf32>
    %34 = vector.shape_cast %33 : vector<1x1x2x128xf32> to vector<2x128xf32>
    %35 = vector.shape_cast %34 : vector<2x128xf32> to vector<2x1x128xf32>
    %c0_23 = arith.constant 0 : index
    %c1_24 = arith.constant 1 : index
    %c0_25 = arith.constant 0 : index
    %c0_26 = arith.constant 0 : index
    %36 = vector.load %arg4[%c0_23, %c1_24, %c0_25, %c0_26] : memref<2x4x4x128xf32, #tpu.memory_space<vmem>>, vector<1x1x4x128xf32>
    %37 = vector.shape_cast %36 : vector<1x1x4x128xf32> to vector<4x128xf32>
    %38 = vector.shape_cast %37 : vector<4x128xf32> to vector<1x4x128xf32>
    %c1_27 = arith.constant 1 : index
    %c1_28 = arith.constant 1 : index
    %c0_29 = arith.constant 0 : index
    %c0_30 = arith.constant 0 : index
    %39 = vector.load %arg4[%c1_27, %c1_28, %c0_29, %c0_30] : memref<2x4x4x128xf32, #tpu.memory_space<vmem>>, vector<1x1x4x128xf32>
    %40 = vector.shape_cast %39 : vector<1x1x4x128xf32> to vector<4x128xf32>
    %41 = vector.shape_cast %40 : vector<4x128xf32> to vector<1x4x128xf32>
    %42 = vector.broadcast %32 : vector<2x1x128xf32> to vector<2x4x128xf32>
    %43 = vector.broadcast %38 : vector<1x4x128xf32> to vector<2x4x128xf32>
    %44 = arith.mulf %42, %43 : vector<2x4x128xf32>
    %45 = vector.broadcast %35 : vector<2x1x128xf32> to vector<2x4x128xf32>
    %46 = vector.broadcast %41 : vector<1x4x128xf32> to vector<2x4x128xf32>
    %47 = arith.mulf %45, %46 : vector<2x4x128xf32>
    %48 = arith.subf %44, %47 : vector<2x4x128xf32>
    %49 = arith.addf %21, %48 : vector<2x4x128xf32>
    %50 = vector.broadcast %32 : vector<2x1x128xf32> to vector<2x4x128xf32>
    %51 = vector.broadcast %41 : vector<1x4x128xf32> to vector<2x4x128xf32>
    %52 = arith.mulf %50, %51 : vector<2x4x128xf32>
    %53 = vector.broadcast %35 : vector<2x1x128xf32> to vector<2x4x128xf32>
    %54 = vector.broadcast %38 : vector<1x4x128xf32> to vector<2x4x128xf32>
    %55 = arith.mulf %53, %54 : vector<2x4x128xf32>
    %56 = arith.addf %52, %55 : vector<2x4x128xf32>
    %57 = arith.addf %29, %56 : vector<2x4x128xf32>
    %c0_31 = arith.constant 0 : index
    %c2 = arith.constant 2 : index
    %c0_32 = arith.constant 0 : index
    %c0_33 = arith.constant 0 : index
    %58 = vector.load %arg3[%c0_31, %c2, %c0_32, %c0_33] : memref<2x4x2x128xf32, #tpu.memory_space<vmem>>, vector<1x1x2x128xf32>
    %59 = vector.shape_cast %58 : vector<1x1x2x128xf32> to vector<2x128xf32>
    %60 = vector.shape_cast %59 : vector<2x128xf32> to vector<2x1x128xf32>
    %c1_34 = arith.constant 1 : index
    %c2_35 = arith.constant 2 : index
    %c0_36 = arith.constant 0 : index
    %c0_37 = arith.constant 0 : index
    %61 = vector.load %arg3[%c1_34, %c2_35, %c0_36, %c0_37] : memref<2x4x2x128xf32, #tpu.memory_space<vmem>>, vector<1x1x2x128xf32>
    %62 = vector.shape_cast %61 : vector<1x1x2x128xf32> to vector<2x128xf32>
    %63 = vector.shape_cast %62 : vector<2x128xf32> to vector<2x1x128xf32>
    %c0_38 = arith.constant 0 : index
    %c2_39 = arith.constant 2 : index
    %c0_40 = arith.constant 0 : index
    %c0_41 = arith.constant 0 : index
    %64 = vector.load %arg4[%c0_38, %c2_39, %c0_40, %c0_41] : memref<2x4x4x128xf32, #tpu.memory_space<vmem>>, vector<1x1x4x128xf32>
    %65 = vector.shape_cast %64 : vector<1x1x4x128xf32> to vector<4x128xf32>
    %66 = vector.shape_cast %65 : vector<4x128xf32> to vector<1x4x128xf32>
    %c1_42 = arith.constant 1 : index
    %c2_43 = arith.constant 2 : index
    %c0_44 = arith.constant 0 : index
    %c0_45 = arith.constant 0 : index
    %67 = vector.load %arg4[%c1_42, %c2_43, %c0_44, %c0_45] : memref<2x4x4x128xf32, #tpu.memory_space<vmem>>, vector<1x1x4x128xf32>
    %68 = vector.shape_cast %67 : vector<1x1x4x128xf32> to vector<4x128xf32>
    %69 = vector.shape_cast %68 : vector<4x128xf32> to vector<1x4x128xf32>
    %70 = vector.broadcast %60 : vector<2x1x128xf32> to vector<2x4x128xf32>
    %71 = vector.broadcast %66 : vector<1x4x128xf32> to vector<2x4x128xf32>
    %72 = arith.mulf %70, %71 : vector<2x4x128xf32>
    %73 = vector.broadcast %63 : vector<2x1x128xf32> to vector<2x4x128xf32>
    %74 = vector.broadcast %69 : vector<1x4x128xf32> to vector<2x4x128xf32>
    %75 = arith.mulf %73, %74 : vector<2x4x128xf32>
    %76 = arith.subf %72, %75 : vector<2x4x128xf32>
    %77 = arith.addf %49, %76 : vector<2x4x128xf32>
    %78 = vector.broadcast %60 : vector<2x1x128xf32> to vector<2x4x128xf32>
    %79 = vector.broadcast %69 : vector<1x4x128xf32> to vector<2x4x128xf32>
    %80 = arith.mulf %78, %79 : vector<2x4x128xf32>
    %81 = vector.broadcast %63 : vector<2x1x128xf32> to vector<2x4x128xf32>
    %82 = vector.broadcast %66 : vector<1x4x128xf32> to vector<2x4x128xf32>
    %83 = arith.mulf %81, %82 : vector<2x4x128xf32>
    %84 = arith.addf %80, %83 : vector<2x4x128xf32>
    %85 = arith.addf %57, %84 : vector<2x4x128xf32>
    %c0_46 = arith.constant 0 : index
    %c3 = arith.constant 3 : index
    %c0_47 = arith.constant 0 : index
    %c0_48 = arith.constant 0 : index
    %86 = vector.load %arg3[%c0_46, %c3, %c0_47, %c0_48] : memref<2x4x2x128xf32, #tpu.memory_space<vmem>>, vector<1x1x2x128xf32>
    %87 = vector.shape_cast %86 : vector<1x1x2x128xf32> to vector<2x128xf32>
    %88 = vector.shape_cast %87 : vector<2x128xf32> to vector<2x1x128xf32>
    %c1_49 = arith.constant 1 : index
    %c3_50 = arith.constant 3 : index
    %c0_51 = arith.constant 0 : index
    %c0_52 = arith.constant 0 : index
    %89 = vector.load %arg3[%c1_49, %c3_50, %c0_51, %c0_52] : memref<2x4x2x128xf32, #tpu.memory_space<vmem>>, vector<1x1x2x128xf32>
    %90 = vector.shape_cast %89 : vector<1x1x2x128xf32> to vector<2x128xf32>
    %91 = vector.shape_cast %90 : vector<2x128xf32> to vector<2x1x128xf32>
    %c0_53 = arith.constant 0 : index
    %c3_54 = arith.constant 3 : index
    %c0_55 = arith.constant 0 : index
    %c0_56 = arith.constant 0 : index
    %92 = vector.load %arg4[%c0_53, %c3_54, %c0_55, %c0_56] : memref<2x4x4x128xf32, #tpu.memory_space<vmem>>, vector<1x1x4x128xf32>
    %93 = vector.shape_cast %92 : vector<1x1x4x128xf32> to vector<4x128xf32>
    %94 = vector.shape_cast %93 : vector<4x128xf32> to vector<1x4x128xf32>
    %c1_57 = arith.constant 1 : index
    %c3_58 = arith.constant 3 : index
    %c0_59 = arith.constant 0 : index
    %c0_60 = arith.constant 0 : index
    %95 = vector.load %arg4[%c1_57, %c3_58, %c0_59, %c0_60] : memref<2x4x4x128xf32, #tpu.memory_space<vmem>>, vector<1x1x4x128xf32>
    %96 = vector.shape_cast %95 : vector<1x1x4x128xf32> to vector<4x128xf32>
    %97 = vector.shape_cast %96 : vector<4x128xf32> to vector<1x4x128xf32>
    %98 = vector.broadcast %88 : vector<2x1x128xf32> to vector<2x4x128xf32>
    %99 = vector.broadcast %94 : vector<1x4x128xf32> to vector<2x4x128xf32>
    %100 = arith.mulf %98, %99 : vector<2x4x128xf32>
    %101 = vector.broadcast %91 : vector<2x1x128xf32> to vector<2x4x128xf32>
    %102 = vector.broadcast %97 : vector<1x4x128xf32> to vector<2x4x128xf32>
    %103 = arith.mulf %101, %102 : vector<2x4x128xf32>
    %104 = arith.subf %100, %103 : vector<2x4x128xf32>
    %105 = arith.addf %77, %104 : vector<2x4x128xf32>
    %106 = vector.broadcast %88 : vector<2x1x128xf32> to vector<2x4x128xf32>
    %107 = vector.broadcast %97 : vector<1x4x128xf32> to vector<2x4x128xf32>
    %108 = arith.mulf %106, %107 : vector<2x4x128xf32>
    %109 = vector.broadcast %91 : vector<2x1x128xf32> to vector<2x4x128xf32>
    %110 = vector.broadcast %94 : vector<1x4x128xf32> to vector<2x4x128xf32>
    %111 = arith.mulf %109, %110 : vector<2x4x128xf32>
    %112 = arith.addf %108, %111 : vector<2x4x128xf32>
    %113 = arith.addf %85, %112 : vector<2x4x128xf32>
    %c0_61 = arith.constant 0 : index
    %c0_62 = arith.constant 0 : index
    %c0_63 = arith.constant 0 : index
    %c0_64 = arith.constant 0 : index
    %114 = vector.load %arg5[%c0_61, %c0_62, %c0_63, %c0_64] : memref<2x2x4x128xf32, #tpu.memory_space<vmem>>, vector<1x2x4x128xf32>
    %115 = vector.shape_cast %114 : vector<1x2x4x128xf32> to vector<2x4x128xf32>
    %116 = vector.shape_cast %105 : vector<2x4x128xf32> to vector<1x2x4x128xf32>
    tpu.vector_store %arg5[%c0_61, %c0_62, %c0_63, %c0_64], %116 {strides = array<i32>} : memref<2x2x4x128xf32, #tpu.memory_space<vmem>>, vector<1x2x4x128xf32>,
    %c1_65 = arith.constant 1 : index
    %c0_66 = arith.constant 0 : index
    %c0_67 = arith.constant 0 : index
    %c0_68 = arith.constant 0 : index
    %117 = vector.load %arg5[%c1_65, %c0_66, %c0_67, %c0_68] : memref<2x2x4x128xf32, #tpu.memory_space<vmem>>, vector<1x2x4x128xf32>
    %118 = vector.shape_cast %117 : vector<1x2x4x128xf32> to vector<2x4x128xf32>
    %119 = vector.shape_cast %113 : vector<2x4x128xf32> to vector<1x2x4x128xf32>
    tpu.vector_store %arg5[%c1_65, %c0_66, %c0_67, %c0_68], %119 {strides = array<i32>} : memref<2x2x4x128xf32, #tpu.memory_space<vmem>>, vector<1x2x4x128xf32>,
    return
  }
  func.func @transform_0(%arg0: i32, %arg1: i32, %arg2: i32) -> (i32, i32, i32, i32) {
    %c0_i32 = arith.constant 0 : i32
    %c0_i32_0 = arith.constant 0 : i32
    %c0_i32_1 = arith.constant 0 : i32
    return %c0_i32, %c0_i32_0, %arg2, %arg0 : i32, i32, i32, i32
  }
  func.func @transform_1(%arg0: i32, %arg1: i32, %arg2: i32) -> (i32, i32, i32, i32) {
    %c0_i32 = arith.constant 0 : i32
    %c0_i32_0 = arith.constant 0 : i32
    %c0_i32_1 = arith.constant 0 : i32
    return %c0_i32, %c0_i32_0, %arg1, %arg0 : i32, i32, i32, i32
  }
  func.func @transform_2(%arg0: i32, %arg1: i32, %arg2: i32) -> (i32, i32, i32, i32) {
    %c0_i32 = arith.constant 0 : i32
    %c0_i32_0 = arith.constant 0 : i32
    return %c0_i32, %arg2, %arg1, %arg0 : i32, i32, i32, i32
  }
}

</mosaic_0001>

<llo_original>
// kernel: reverse.0
$region0: #{reverse.0}
  %s0 = inlined_call_operand.vmem [shape: f32[2,4,16,7], index: 0, kind: input, shape index: {}]
  %s1 = inlined_call_operand.vmem [shape: f32[2,4,16,7], index: 1, kind: output, shape index: {}]
  $region1: #{reverse.0} parent=0
    #allocation0 [shape = 'u8[65536]{0}', space=vmem, size = 0x10000, scoped, tag = 'operand span for operand 0']
    #allocation1 [shape = 'u8[32768]{0}', space=vmem, size = 0x8000, scoped, tag = 'operand span for operand 1']
    %s2 = scalar_lea.vmem [#allocation0], 8
    // Predicated region
    $region2: #{reverse.0} parent=1 // pred_check
      _
    $region3: #{reverse.0} parent=1 // pred_check_branch
      %4 = sbr.rel (0) target = $region5
    $region4: #{reverse.0} parent=1 // pred_region
      // Predicated region
      $region6: #{reverse.0} parent=4 // pred_check
        _
      $region7: #{reverse.0} parent=4 // pred_check_branch
        %6 = sbr.rel (0) target = $region9
      $region8: #{reverse.0} parent=4 // pred_region
        // Predicated region
        $region21: #{reverse.0} parent=8 // pred_check
          _
        $region22: #{reverse.0} parent=8 // pred_check_branch
          %35 = sbr.rel (0) target = $region24
        $region23: #{reverse.0} parent=8 // pred_region
          loop: start=0, step=1, limit=1
          $region25: #{reverse.0} parent=23 // loop_pre_header
            _
          $region26: #{reverse.0} parent=23 // loop_header
            %s37 = sphi 0, %s41
            %p38 = scmp.ge.s32.totalorder %s37, 1
            %s42 = sphi %s0, %s0
            %s43 = sphi %s2, %s2
          $region27: #{reverse.0} parent=23 // loop_header_branch
            %40 = sbr.rel (%p38) target = $region31
          $region28: #{reverse.0} parent=23 // loop_body
            %v44 = vld [vmem:[%s42] sm:$0xff]
            %45 = vst [vmem:[%s43] sm:$0xff] %v44
            %v46 = vld [vmem:[%s42 + $0x8] sm:$0xff]
            %47 = vst [vmem:[%s43 + $0x10] sm:$0xff] %v46
            %v48 = vld [vmem:[%s42 + $0x10] sm:$0xff]
            %49 = vst [vmem:[%s43 + $0x20] sm:$0xff] %v48
            %v50 = vld [vmem:[%s42 + $0x18] sm:$0xff]
            %51 = vst [vmem:[%s43 + $0x30] sm:$0xff] %v50
            %v52 = vld [vmem:[%s42 + $0x20] sm:$0xff]
            %53 = vst [vmem:[%s43 + $0x40] sm:$0xff] %v52
            %v54 = vld [vmem:[%s42 + $0x28] sm:$0xff]
            %55 = vst [vmem:[%s43 + $0x50] sm:$0xff] %v54
            %v56 = vld [vmem:[%s42 + $0x30] sm:$0xff]
            %57 = vst [vmem:[%s43 + $0x60] sm:$0xff] %v56
            %v58 = vld [vmem:[%s42 + $0x38] sm:$0xff]
            %59 = vst [vmem:[%s43 + $0x70] sm:$0xff] %v58
          $region29: #{reverse.0} parent=23 // loop_footer
            %s41 = sadd.s32 1, %s37
          $region30: #{reverse.0} parent=23 // loop_footer_branch
            %36 = sbr.rel target = $region26
          $region31: #{reverse.0} parent=23 // loop_exit
            _
        $region24: #{reverse.0} parent=8 // pred_fallthru
          _
        // Predicated region
        $region32: #{reverse.0} parent=8 // pred_check
          _
        $region33: #{reverse.0} parent=8 // pred_check_branch
          %61 = sbr.rel target = $region35
        $region34: #{reverse.0} parent=8 // pred_region
          _
        $region35: #{reverse.0} parent=8 // pred_fallthru
          _
      $region9: #{reverse.0} parent=4 // pred_fallthru
        _
      // Predicated region
      $region10: #{reverse.0} parent=4 // pred_check
        _
      $region11: #{reverse.0} parent=4 // pred_check_branch
        %8 = sbr.rel target = $region13
      $region12: #{reverse.0} parent=4 // pred_region
        loop: start=0, step=1, limit=1
        $region14: #{reverse.0} parent=12 // loop_pre_header
          _
        $region15: #{reverse.0} parent=12 // loop_header
          %s11 = sphi 0, %s15
          %p12 = scmp.ge.s32.totalorder %s11, 1
          %s16 = sphi %s0, %s0
          %s17 = sphi %s2, %s2
        $region16: #{reverse.0} parent=12 // loop_header_branch
          %14 = sbr.rel (%p12) target = $region20
        $region17: #{reverse.0} parent=12 // loop_body
          %v18 = vld [vmem:[%s16] sm:$0xff]
          %19 = vst [vmem:[%s17] sm:$0xff] %v18
          %v20 = vld [vmem:[%s16 + $0x8] sm:$0xff]
          %21 = vst [vmem:[%s17 + $0x10] sm:$0xff] %v20
          %v22 = vld [vmem:[%s16 + $0x10] sm:$0xff]
          %23 = vst [vmem:[%s17 + $0x20] sm:$0xff] %v22
          %v24 = vld [vmem:[%s16 + $0x18] sm:$0xff]
          %25 = vst [vmem:[%s17 + $0x30] sm:$0xff] %v24
          %v26 = vld [vmem:[%s16 + $0x20] sm:$0xff]
          %27 = vst [vmem:[%s17 + $0x40] sm:$0xff] %v26
          %v28 = vld [vmem:[%s16 + $0x28] sm:$0xff]
          %29 = vst [vmem:[%s17 + $0x50] sm:$0xff] %v28
          %v30 = vld [vmem:[%s16 + $0x30] sm:$0xff]
          %31 = vst [vmem:[%s17 + $0x60] sm:$0xff] %v30
          %v32 = vld [vmem:[%s16 + $0x38] sm:$0xff]
          %33 = vst [vmem:[%s17 + $0x70] sm:$0xff] %v32
        $region18: #{reverse.0} parent=12 // loop_footer
          %s15 = sadd.s32 1, %s11
        $region19: #{reverse.0} parent=12 // loop_footer_branch
          %10 = sbr.rel target = $region15
        $region20: #{reverse.0} parent=12 // loop_exit
          _
      $region13: #{reverse.0} parent=4 // pred_fallthru
        _
    $region5: #{reverse.0} parent=1 // pred_fallthru
      _
    %62 = vnop
    %s63 = scalar_lea.vmem [#allocation0], 7
    %v64 = vld [vmem:[%s63] ss:$-1 sm:$0xff]
    %v65 = vrot.slane %v64, 1
    %66 = vst [vmem:[#allocation1] sm:$0xff] %v65
    %s67 = scalar_lea.vmem [#allocation0], 8
    %s68 = scalar_lea.vmem %s67, 7 [#allocation0]
    %v69 = vld [vmem:[%s68] ss:$-1 sm:$0xff]
    %v70 = vrot.slane %v69, 1
    %v71 = vlaneseq
    %v72 = vshrl.u32 %v71, 7
    %vm73 = vcmp.lt.s32.totalorder %v72, 7
    %74 = vst.msk [vmem:[#allocation1] sm:$0xff] %vm73, %v70
    %s75 = scalar_lea.vmem [#allocation1], 8
    %s76 = scalar_lea.vmem [#allocation0], 16
    %s77 = scalar_lea.vmem %s76, 7 [#allocation0]
    %v78 = vld [vmem:[%s77] ss:$-1 sm:$0xff]
    %v79 = vrot.slane %v78, 1
    %80 = vst [vmem:[%s75] sm:$0xff] %v79
    %s81 = scalar_lea.vmem %s76, 8 [#allocation0]
    %s82 = scalar_lea.vmem %s81, 7 [#allocation0]
    %v83 = vld [vmem:[%s82] ss:$-1 sm:$0xff]
    %v84 = vrot.slane %v83, 1
    %v85 = vlaneseq
    %v86 = vshrl.u32 %v85, 7
    %vm87 = vcmp.lt.s32.totalorder %v86, 7
    %88 = vst.msk [vmem:[%s75] sm:$0xff] %vm87, %v84
    %s89 = scalar_lea.vmem [#allocation1], 16
    %s90 = scalar_lea.vmem [#allocation0], 32
    %s91 = scalar_lea.vmem %s90, 7 [#allocation0]
    %v92 = vld [vmem:[%s91] ss:$-1 sm:$0xff]
    %v93 = vrot.slane %v92, 1
    %94 = vst [vmem:[%s89] sm:$0xff] %v93
    %s95 = scalar_lea.vmem %s90, 8 [#allocation0]
    %s96 = scalar_lea.vmem %s95, 7 [#allocation0]
    %v97 = vld [vmem:[%s96] ss:$-1 sm:$0xff]
    %v98 = vrot.slane %v97, 1
    %v99 = vlaneseq
    %v100 = vshrl.u32 %v99, 7
    %vm101 = vcmp.lt.s32.totalorder %v100, 7
    %102 = vst.msk [vmem:[%s89] sm:$0xff] %vm101, %v98
    %s103 = scalar_lea.vmem [#allocation1], 24
    %s104 = scalar_lea.vmem [#allocation0], 48
    %s105 = scalar_lea.vmem %s104, 7 [#allocation0]
    %v106 = vld [vmem:[%s105] ss:$-1 sm:$0xff]
    %v107 = vrot.slane %v106, 1
    %108 = vst [vmem:[%s103] sm:$0xff] %v107
    %s109 = scalar_lea.vmem %s104, 8 [#allocation0]
    %s110 = scalar_lea.vmem %s109, 7 [#allocation0]
    %v111 = vld [vmem:[%s110] ss:$-1 sm:$0xff]
    %v112 = vrot.slane %v111, 1
    %v113 = vlaneseq
    %v114 = vshrl.u32 %v113, 7
    %vm115 = vcmp.lt.s32.totalorder %v114, 7
    %116 = vst.msk [vmem:[%s103] sm:$0xff] %vm115, %v112
    %s117 = scalar_lea.vmem [#allocation1], 32
    %s118 = scalar_lea.vmem [#allocation0], 64
    %s119 = scalar_lea.vmem %s118, 7 [#allocation0]
    %v120 = vld [vmem:[%s119] ss:$-1 sm:$0xff]
    %v121 = vrot.slane %v120, 1
    %122 = vst [vmem:[%s117] sm:$0xff] %v121
    %s123 = scalar_lea.vmem %s118, 8 [#allocation0]
    %s124 = scalar_lea.vmem %s123, 7 [#allocation0]
    %v125 = vld [vmem:[%s124] ss:$-1 sm:$0xff]
    %v126 = vrot.slane %v125, 1
    %v127 = vlaneseq
    %v128 = vshrl.u32 %v127, 7
    %vm129 = vcmp.lt.s32.totalorder %v128, 7
    %130 = vst.msk [vmem:[%s117] sm:$0xff] %vm129, %v126
    %s131 = scalar_lea.vmem [#allocation1], 40
    %s132 = scalar_lea.vmem [#allocation0], 80
    %s133 = scalar_lea.vmem %s132, 7 [#allocation0]
    %v134 = vld [vmem:[%s133] ss:$-1 sm:$0xff]
    %v135 = vrot.slane %v134, 1
    %136 = vst [vmem:[%s131] sm:$0xff] %v135
    %s137 = scalar_lea.vmem %s132, 8 [#allocation0]
    %s138 = scalar_lea.vmem %s137, 7 [#allocation0]
    %v139 = vld [vmem:[%s138] ss:$-1 sm:$0xff]
    %v140 = vrot.slane %v139, 1
    %v141 = vlaneseq
    %v142 = vshrl.u32 %v141, 7
    %vm143 = vcmp.lt.s32.totalorder %v142, 7
    %144 = vst.msk [vmem:[%s131] sm:$0xff] %vm143, %v140
    %s145 = scalar_lea.vmem [#allocation1], 48
    %s146 = scalar_lea.vmem [#allocation0], 96
    %s147 = scalar_lea.vmem %s146, 7 [#allocation0]
    %v148 = vld [vmem:[%s147] ss:$-1 sm:$0xff]
    %v149 = vrot.slane %v148, 1
    %150 = vst [vmem:[%s145] sm:$0xff] %v149
    %s151 = scalar_lea.vmem %s146, 8 [#allocation0]
    %s152 = scalar_lea.vmem %s151, 7 [#allocation0]
    %v153 = vld [vmem:[%s152] ss:$-1 sm:$0xff]
    %v154 = vrot.slane %v153, 1
    %v155 = vlaneseq
    %v156 = vshrl.u32 %v155, 7
    %vm157 = vcmp.lt.s32.totalorder %v156, 7
    %158 = vst.msk [vmem:[%s145] sm:$0xff] %vm157, %v154
    %s159 = scalar_lea.vmem [#allocation1], 56
    %s160 = scalar_lea.vmem [#allocation0], 112
    %s161 = scalar_lea.vmem %s160, 7 [#allocation0]
    %v162 = vld [vmem:[%s161] ss:$-1 sm:$0xff]
    %v163 = vrot.slane %v162, 1
    %164 = vst [vmem:[%s159] sm:$0xff] %v163
    %s165 = scalar_lea.vmem %s160, 8 [#allocation0]
    %s166 = scalar_lea.vmem %s165, 7 [#allocation0]
    %v167 = vld [vmem:[%s166] ss:$-1 sm:$0xff]
    %v168 = vrot.slane %v167, 1
    %v169 = vlaneseq
    %v170 = vshrl.u32 %v169, 7
    %vm171 = vcmp.lt.s32.totalorder %v170, 7
    %172 = vst.msk [vmem:[%s159] sm:$0xff] %vm171, %v168
    // Predicated region
    $region36: #{reverse.0} parent=1 // pred_check
      _
    $region37: #{reverse.0} parent=1 // pred_check_branch
      %174 = sbr.rel (0) target = $region39
    $region38: #{reverse.0} parent=1 // pred_region
      // Predicated region
      $region40: #{reverse.0} parent=38 // pred_check
        _
      $region41: #{reverse.0} parent=38 // pred_check_branch
        %176 = sbr.rel (0) target = $region43
      $region42: #{reverse.0} parent=38 // pred_region
        // Predicated region
        $region55: #{reverse.0} parent=42 // pred_check
          _
        $region56: #{reverse.0} parent=42 // pred_check_branch
          %205 = sbr.rel (0) target = $region58
        $region57: #{reverse.0} parent=42 // pred_region
          loop: start=0, step=1, limit=1
          $region59: #{reverse.0} parent=57 // loop_pre_header
            _
          $region60: #{reverse.0} parent=57 // loop_header
            %s207 = sphi 0, %s211
            %p208 = scmp.ge.s32.totalorder %s207, 1
            %s212 = sphi [#allocation1], [#allocation1]
            %s213 = sphi %s1, %s1
          $region61: #{reverse.0} parent=57 // loop_header_branch
            %210 = sbr.rel (%p208) target = $region65
          $region62: #{reverse.0} parent=57 // loop_body
            %v214 = vld [vmem:[%s212] sm:$0xff]
            %215 = vst [vmem:[%s213] sm:$0xff] %v214
            %v216 = vld [vmem:[%s212 + $0x8] sm:$0xff]
            %217 = vst [vmem:[%s213 + $0x8] sm:$0xff] %v216
            %v218 = vld [vmem:[%s212 + $0x10] sm:$0xff]
            %219 = vst [vmem:[%s213 + $0x10] sm:$0xff] %v218
            %v220 = vld [vmem:[%s212 + $0x18] sm:$0xff]
            %221 = vst [vmem:[%s213 + $0x18] sm:$0xff] %v220
            %v222 = vld [vmem:[%s212 + $0x20] sm:$0xff]
            %223 = vst [vmem:[%s213 + $0x20] sm:$0xff] %v222
            %v224 = vld [vmem:[%s212 + $0x28] sm:$0xff]
            %225 = vst [vmem:[%s213 + $0x28] sm:$0xff] %v224
            %v226 = vld [vmem:[%s212 + $0x30] sm:$0xff]
            %227 = vst [vmem:[%s213 + $0x30] sm:$0xff] %v226
            %v228 = vld [vmem:[%s212 + $0x38] sm:$0xff]
            %229 = vst [vmem:[%s213 + $0x38] sm:$0xff] %v228
          $region63: #{reverse.0} parent=57 // loop_footer
            %s211 = sadd.s32 1, %s207
          $region64: #{reverse.0} parent=57 // loop_footer_branch
            %206 = sbr.rel target = $region60
          $region65: #{reverse.0} parent=57 // loop_exit
            _
        $region58: #{reverse.0} parent=42 // pred_fallthru
          _
        // Predicated region
        $region66: #{reverse.0} parent=42 // pred_check
          _
        $region67: #{reverse.0} parent=42 // pred_check_branch
          %231 = sbr.rel target = $region69
        $region68: #{reverse.0} parent=42 // pred_region
          _
        $region69: #{reverse.0} parent=42 // pred_fallthru
          _
      $region43: #{reverse.0} parent=38 // pred_fallthru
        _
      // Predicated region
      $region44: #{reverse.0} parent=38 // pred_check
        _
      $region45: #{reverse.0} parent=38 // pred_check_branch
        %178 = sbr.rel target = $region47
      $region46: #{reverse.0} parent=38 // pred_region
        loop: start=0, step=1, limit=1
        $region48: #{reverse.0} parent=46 // loop_pre_header
          _
        $region49: #{reverse.0} parent=46 // loop_header
          %s181 = sphi 0, %s185
          %p182 = scmp.ge.s32.totalorder %s181, 1
          %s186 = sphi [#allocation1], [#allocation1]
          %s187 = sphi %s1, %s1
        $region50: #{reverse.0} parent=46 // loop_header_branch
          %184 = sbr.rel (%p182) target = $region54
        $region51: #{reverse.0} parent=46 // loop_body
          %v188 = vld [vmem:[%s186] sm:$0xff]
          %189 = vst [vmem:[%s187] sm:$0xff] %v188
          %v190 = vld [vmem:[%s186 + $0x8] sm:$0xff]
          %191 = vst [vmem:[%s187 + $0x8] sm:$0xff] %v190
          %v192 = vld [vmem:[%s186 + $0x10] sm:$0xff]
          %193 = vst [vmem:[%s187 + $0x10] sm:$0xff] %v192
          %v194 = vld [vmem:[%s186 + $0x18] sm:$0xff]
          %195 = vst [vmem:[%s187 + $0x18] sm:$0xff] %v194
          %v196 = vld [vmem:[%s186 + $0x20] sm:$0xff]
          %197 = vst [vmem:[%s187 + $0x20] sm:$0xff] %v196
          %v198 = vld [vmem:[%s186 + $0x28] sm:$0xff]
          %199 = vst [vmem:[%s187 + $0x28] sm:$0xff] %v198
          %v200 = vld [vmem:[%s186 + $0x30] sm:$0xff]
          %201 = vst [vmem:[%s187 + $0x30] sm:$0xff] %v200
          %v202 = vld [vmem:[%s186 + $0x38] sm:$0xff]
          %203 = vst [vmem:[%s187 + $0x38] sm:$0xff] %v202
        $region52: #{reverse.0} parent=46 // loop_footer
          %s185 = sadd.s32 1, %s181
        $region53: #{reverse.0} parent=46 // loop_footer_branch
          %180 = sbr.rel target = $region49
        $region54: #{reverse.0} parent=46 // loop_exit
          _
      $region47: #{reverse.0} parent=38 // pred_fallthru
        _
    $region39: #{reverse.0} parent=1 // pred_fallthru
      _
    %232 = vnop

// kernel: spectral_conv2d_fast.1
$region0: #{spectral_conv2d_fast.1}
  #allocation0 [shape = 'u32[]', space=smem, size = 0x4, offset = 0x4, fixed_abs, tag = 'smem constant byte address 0x4 - core index']
  #allocation1 [shape = 'u32[144,128]{1,0:T(1,128)}', space=vmem, size = 0x12000, scoped, tag = 'internal scratch']
  %s0 = inlined_call_operand.vmem [shape: f32[2,4,2,128], index: 0, kind: input, shape index: {}]
  %s1 = inlined_call_operand.vmem [shape: f32[2,4,4,128], index: 1, kind: input, shape index: {}]
  %s2 = inlined_call_operand.vmem [shape: f32[2,2,4,128], index: 2, kind: output, shape index: {}]
  %s3 = sld [smem:[#allocation0]]
  $region18: #{spectral_conv2d_fast.1} parent=0
    _
  %s5 = ssub.s32 1, %s3
  %s6 = scalar_select 0, %s5, %s3
  // Predicated region
  $region2: #{spectral_conv2d_fast.1} parent=0 // pred_check
    _
  $region3: #{spectral_conv2d_fast.1} parent=0 // pred_check_branch
    %8 = sbr.rel (0) target = $region5
  $region4: #{spectral_conv2d_fast.1} parent=0 // pred_region
    _
  $region5: #{spectral_conv2d_fast.1} parent=0 // pred_fallthru
    _
  // Predicated region
  $region6: #{spectral_conv2d_fast.1} parent=0 // pred_check
    _
  $region7: #{spectral_conv2d_fast.1} parent=0 // pred_check_branch
    %10 = sbr.rel (0) target = $region9
  $region8: #{spectral_conv2d_fast.1} parent=0 // pred_region
    _
  $region9: #{spectral_conv2d_fast.1} parent=0 // pred_fallthru
    _
  %v11 = vld [vmem:[%s0] sm:$0x3]
  %v14 = vunpack.c.l.s4 1966171168
  %v15 = vunpack.c.0.s8 %v14
  %v16 = vlaneseq
  %v17 = vshrl.u32 %v16, 7
  %v18 = vsub.s32 %v15, %v17
  %v19 = vrot.slane %v11, %v18
  %v20 = vcombine.high %v19, %v19
  %v22 = vunpack.c.l.s4 1966171168
  %v23 = vunpack.c.0.s8 %v22
  %v24 = vlaneseq
  %v25 = vshrl.u32 %v24, 7
  %v26 = vsub.s32 %v23, %v25
  %v27 = vrot.slane %v19, %v26
  %v29 = vunpack.c.l.s4 1966171168
  %v30 = vunpack.c.0.s8 %v29
  %v31 = vlaneseq
  %v32 = vshrl.u32 %v31, 7
  %v33 = vsub.s32 %v30, %v32
  %v34 = vrot.slane %v20, %v33
  %s35 = scalar_lea.vmem %s0, 8
  %v36 = vld [vmem:[%s35] sm:$0x3]
  %v39 = vunpack.c.l.s4 1966171168
  %v40 = vunpack.c.0.s8 %v39
  %v41 = vlaneseq
  %v42 = vshrl.u32 %v41, 7
  %v43 = vsub.s32 %v40, %v42
  %v44 = vrot.slane %v36, %v43
  %v45 = vcombine.high %v44, %v44
  %v47 = vunpack.c.l.s4 1966171168
  %v48 = vunpack.c.0.s8 %v47
  %v49 = vlaneseq
  %v50 = vshrl.u32 %v49, 7
  %v51 = vsub.s32 %v48, %v50
  %v52 = vrot.slane %v44, %v51
  %v54 = vunpack.c.l.s4 1966171168
  %v55 = vunpack.c.0.s8 %v54
  %v56 = vlaneseq
  %v57 = vshrl.u32 %v56, 7
  %v58 = vsub.s32 %v55, %v57
  %v59 = vrot.slane %v45, %v58
  %v60 = vld [vmem:[%s1] sm:$0xf]
  %s61 = scalar_lea.vmem %s1, 16
  %v62 = vld [vmem:[%s61] sm:$0xf]
  %v63 = vlaneseq
  %v64 = vshrl.u32 %v63, 7
  %v65 = vsub.s32 0, %v64
  %v66 = vrot.slane %v27, %v65
  %v67 = vlaneseq
  %v68 = vshrl.u32 %v67, 7
  %v69 = vsub.s32 0, %v68
  %v70 = vrot.slane %v34, %v69
  %v73 = vmul.f32 %v66, %v60
  %v74 = vmul.f32 %v70, %v60
  %v75 = vlaneseq
  %v76 = vshrl.u32 %v75, 7
  %v77 = vsub.s32 0, %v76
  %v78 = vrot.slane %v52, %v77
  %v79 = vlaneseq
  %v80 = vshrl.u32 %v79, 7
  %v81 = vsub.s32 0, %v80
  %v82 = vrot.slane %v59, %v81
  %v85 = vmul.f32 %v78, %v62
  %v86 = vmul.f32 %v82, %v62
  %v87 = vsub.f32 %v73, %v85
  %v88 = vsub.f32 %v74, %v86
  %v89 = vadd.f32 %v87, 0.0
  %v90 = vadd.f32 %v88, 0.0
  %v91 = vmul.f32 %v66, %v62
  %v92 = vmul.f32 %v70, %v62
  %v93 = vmul.f32 %v78, %v60
  %v94 = vmul.f32 %v82, %v60
  %v95 = vadd.f32 %v91, %v93
  %v96 = vadd.f32 %v92, %v94
  %v97 = vadd.f32 %v95, 0.0
  %v98 = vadd.f32 %v96, 0.0
  %s99 = scalar_lea.vmem %s0, 2
  %v100 = vld [vmem:[%s99] sm:$0x3]
  %v103 = vunpack.c.l.s4 1966171168
  %v104 = vunpack.c.0.s8 %v103
  %v105 = vlaneseq
  %v106 = vshrl.u32 %v105, 7
  %v107 = vsub.s32 %v104, %v106
  %v108 = vrot.slane %v100, %v107
  %v109 = vcombine.high %v108, %v108
  %v111 = vunpack.c.l.s4 1966171168
  %v112 = vunpack.c.0.s8 %v111
  %v113 = vlaneseq
  %v114 = vshrl.u32 %v113, 7
  %v115 = vsub.s32 %v112, %v114
  %v116 = vrot.slane %v108, %v115
  %v118 = vunpack.c.l.s4 1966171168
  %v119 = vunpack.c.0.s8 %v118
  %v120 = vlaneseq
  %v121 = vshrl.u32 %v120, 7
  %v122 = vsub.s32 %v119, %v121
  %v123 = vrot.slane %v109, %v122
  %s124 = scalar_lea.vmem %s0, 10
  %v125 = vld [vmem:[%s124] sm:$0x3]
  %v128 = vunpack.c.l.s4 1966171168
  %v129 = vunpack.c.0.s8 %v128
  %v130 = vlaneseq
  %v131 = vshrl.u32 %v130, 7
  %v132 = vsub.s32 %v129, %v131
  %v133 = vrot.slane %v125, %v132
  %v134 = vcombine.high %v133, %v133
  %v136 = vunpack.c.l.s4 1966171168
  %v137 = vunpack.c.0.s8 %v136
  %v138 = vlaneseq
  %v139 = vshrl.u32 %v138, 7
  %v140 = vsub.s32 %v137, %v139
  %v141 = vrot.slane %v133, %v140
  %v143 = vunpack.c.l.s4 1966171168
  %v144 = vunpack.c.0.s8 %v143
  %v145 = vlaneseq
  %v146 = vshrl.u32 %v145, 7
  %v147 = vsub.s32 %v144, %v146
  %v148 = vrot.slane %v134, %v147
  %s149 = scalar_lea.vmem %s1, 4
  %v150 = vld [vmem:[%s149] sm:$0xf]
  %s151 = scalar_lea.vmem %s1, 20
  %v152 = vld [vmem:[%s151] sm:$0xf]
  %v153 = vlaneseq
  %v154 = vshrl.u32 %v153, 7
  %v155 = vsub.s32 0, %v154
  %v156 = vrot.slane %v116, %v155
  %v157 = vlaneseq
  %v158 = vshrl.u32 %v157, 7
  %v159 = vsub.s32 0, %v158
  %v160 = vrot.slane %v123, %v159
  %v163 = vmul.f32 %v156, %v150
  %v164 = vmul.f32 %v160, %v150
  %v165 = vlaneseq
  %v166 = vshrl.u32 %v165, 7
  %v167 = vsub.s32 0, %v166
  %v168 = vrot.slane %v141, %v167
  %v169 = vlaneseq
  %v170 = vshrl.u32 %v169, 7
  %v171 = vsub.s32 0, %v170
  %v172 = vrot.slane %v148, %v171
  %v175 = vmul.f32 %v168, %v152
  %v176 = vmul.f32 %v172, %v152
  %v177 = vsub.f32 %v163, %v175
  %v178 = vsub.f32 %v164, %v176
  %v179 = vadd.f32 %v89, %v177
  %v180 = vadd.f32 %v90, %v178
  %v181 = vmul.f32 %v156, %v152
  %v182 = vmul.f32 %v160, %v152
  %v183 = vmul.f32 %v168, %v150
  %v184 = vmul.f32 %v172, %v150
  %v185 = vadd.f32 %v181, %v183
  %v186 = vadd.f32 %v182, %v184
  %v187 = vadd.f32 %v97, %v185
  %v188 = vadd.f32 %v98, %v186
  %s189 = scalar_lea.vmem %s0, 4
  %v190 = vld [vmem:[%s189] sm:$0x3]
  %v193 = vunpack.c.l.s4 1966171168
  %v194 = vunpack.c.0.s8 %v193
  %v195 = vlaneseq
  %v196 = vshrl.u32 %v195, 7
  %v197 = vsub.s32 %v194, %v196
  %v198 = vrot.slane %v190, %v197
  %v199 = vcombine.high %v198, %v198
  %v201 = vunpack.c.l.s4 1966171168
  %v202 = vunpack.c.0.s8 %v201
  %v203 = vlaneseq
  %v204 = vshrl.u32 %v203, 7
  %v205 = vsub.s32 %v202, %v204
  %v206 = vrot.slane %v198, %v205
  %v208 = vunpack.c.l.s4 1966171168
  %v209 = vunpack.c.0.s8 %v208
  %v210 = vlaneseq
  %v211 = vshrl.u32 %v210, 7
  %v212 = vsub.s32 %v209, %v211
  %v213 = vrot.slane %v199, %v212
  %s214 = scalar_lea.vmem %s0, 12
  %v215 = vld [vmem:[%s214] sm:$0x3]
  %v218 = vunpack.c.l.s4 1966171168
  %v219 = vunpack.c.0.s8 %v218
  %v220 = vlaneseq
  %v221 = vshrl.u32 %v220, 7
  %v222 = vsub.s32 %v219, %v221
  %v223 = vrot.slane %v215, %v222
  %v224 = vcombine.high %v223, %v223
  %v226 = vunpack.c.l.s4 1966171168
  %v227 = vunpack.c.0.s8 %v226
  %v228 = vlaneseq
  %v229 = vshrl.u32 %v228, 7
  %v230 = vsub.s32 %v227, %v229
  %v231 = vrot.slane %v223, %v230
  %v233 = vunpack.c.l.s4 1966171168
  %v234 = vunpack.c.0.s8 %v233
  %v235 = vlaneseq
  %v236 = vshrl.u32 %v235, 7
  %v237 = vsub.s32 %v234, %v236
  %v238 = vrot.slane %v224, %v237
  %s239 = scalar_lea.vmem %s1, 8
  %v240 = vld [vmem:[%s239] sm:$0xf]
  %s241 = scalar_lea.vmem %s1, 24
  %v242 = vld [vmem:[%s241] sm:$0xf]
  %v243 = vlaneseq
  %v244 = vshrl.u32 %v243, 7
  %v245 = vsub.s32 0, %v244
  %v246 = vrot.slane %v206, %v245
  %v247 = vlaneseq
  %v248 = vshrl.u32 %v247, 7
  %v249 = vsub.s32 0, %v248
  %v250 = vrot.slane %v213, %v249
  %v253 = vmul.f32 %v246, %v240
  %v254 = vmul.f32 %v250, %v240
  %v255 = vlaneseq
  %v256 = vshrl.u32 %v255, 7
  %v257 = vsub.s32 0, %v256
  %v258 = vrot.slane %v231, %v257
  %v259 = vlaneseq
  %v260 = vshrl.u32 %v259, 7
  %v261 = vsub.s32 0, %v260
  %v262 = vrot.slane %v238, %v261
  %v265 = vmul.f32 %v258, %v242
  %v266 = vmul.f32 %v262, %v242
  %v267 = vsub.f32 %v253, %v265
  %v268 = vsub.f32 %v254, %v266
  %v269 = vadd.f32 %v179, %v267
  %v270 = vadd.f32 %v180, %v268
  %v271 = vmul.f32 %v246, %v242
  %v272 = vmul.f32 %v250, %v242
  %v273 = vmul.f32 %v258, %v240
  %v274 = vmul.f32 %v262, %v240
  %v275 = vadd.f32 %v271, %v273
  %v276 = vadd.f32 %v272, %v274
  %v277 = vadd.f32 %v187, %v275
  %v278 = vadd.f32 %v188, %v276
  %s279 = scalar_lea.vmem %s0, 6
  %v280 = vld [vmem:[%s279] sm:$0x3]
  %v283 = vunpack.c.l.s4 1966171168
  %v284 = vunpack.c.0.s8 %v283
  %v285 = vlaneseq
  %v286 = vshrl.u32 %v285, 7
  %v287 = vsub.s32 %v284, %v286
  %v288 = vrot.slane %v280, %v287
  %v289 = vcombine.high %v288, %v288
  %v291 = vunpack.c.l.s4 1966171168
  %v292 = vunpack.c.0.s8 %v291
  %v293 = vlaneseq
  %v294 = vshrl.u32 %v293, 7
  %v295 = vsub.s32 %v292, %v294
  %v296 = vrot.slane %v288, %v295
  %v298 = vunpack.c.l.s4 1966171168
  %v299 = vunpack.c.0.s8 %v298
  %v300 = vlaneseq
  %v301 = vshrl.u32 %v300, 7
  %v302 = vsub.s32 %v299, %v301
  %v303 = vrot.slane %v289, %v302
  %s304 = scalar_lea.vmem %s0, 14
  %v305 = vld [vmem:[%s304] sm:$0x3]
  %v308 = vunpack.c.l.s4 1966171168
  %v309 = vunpack.c.0.s8 %v308
  %v310 = vlaneseq
  %v311 = vshrl.u32 %v310, 7
  %v312 = vsub.s32 %v309, %v311
  %v313 = vrot.slane %v305, %v312
  %v314 = vcombine.high %v313, %v313
  %v316 = vunpack.c.l.s4 1966171168
  %v317 = vunpack.c.0.s8 %v316
  %v318 = vlaneseq
  %v319 = vshrl.u32 %v318, 7
  %v320 = vsub.s32 %v317, %v319
  %v321 = vrot.slane %v313, %v320
  %v323 = vunpack.c.l.s4 1966171168
  %v324 = vunpack.c.0.s8 %v323
  %v325 = vlaneseq
  %v326 = vshrl.u32 %v325, 7
  %v327 = vsub.s32 %v324, %v326
  %v328 = vrot.slane %v314, %v327
  %s329 = scalar_lea.vmem %s1, 12
  %v330 = vld [vmem:[%s329] sm:$0xf]
  %s331 = scalar_lea.vmem %s1, 28
  %v332 = vld [vmem:[%s331] sm:$0xf]
  %v333 = vlaneseq
  %v334 = vshrl.u32 %v333, 7
  %v335 = vsub.s32 0, %v334
  %v336 = vrot.slane %v296, %v335
  %v337 = vlaneseq
  %v338 = vshrl.u32 %v337, 7
  %v339 = vsub.s32 0, %v338
  %v340 = vrot.slane %v303, %v339
  %v343 = vmul.f32 %v336, %v330
  %v344 = vmul.f32 %v340, %v330
  %v345 = vlaneseq
  %v346 = vshrl.u32 %v345, 7
  %v347 = vsub.s32 0, %v346
  %v348 = vrot.slane %v321, %v347
  %v349 = vlaneseq
  %v350 = vshrl.u32 %v349, 7
  %v351 = vsub.s32 0, %v350
  %v352 = vrot.slane %v328, %v351
  %v355 = vmul.f32 %v348, %v332
  %v356 = vmul.f32 %v352, %v332
  %v357 = vsub.f32 %v343, %v355
  %v358 = vsub.f32 %v344, %v356
  %v359 = vadd.f32 %v269, %v357
  %v360 = vadd.f32 %v270, %v358
  %v361 = vmul.f32 %v336, %v332
  %v362 = vmul.f32 %v340, %v332
  %v363 = vmul.f32 %v348, %v330
  %v364 = vmul.f32 %v352, %v330
  %v365 = vadd.f32 %v361, %v363
  %v366 = vadd.f32 %v362, %v364
  %v367 = vadd.f32 %v277, %v365
  %v368 = vadd.f32 %v278, %v366
  %369 = vst [vmem:[%s2] sm:$0xf] %v359
  %370 = vst [vmem:[%s2 + $0x4] sm:$0xf] %v360
  %s371 = scalar_lea.vmem %s2, 8
  %372 = vst [vmem:[%s371] sm:$0xf] %v367
  %373 = vst [vmem:[%s371 + $0x4] sm:$0xf] %v368
  // Predicated region
  $region10: #{spectral_conv2d_fast.1} parent=0 // pred_check
    _
  $region11: #{spectral_conv2d_fast.1} parent=0 // pred_check_branch
    %375 = sbr.rel (0) target = $region13
  $region12: #{spectral_conv2d_fast.1} parent=0 // pred_region
    _
  $region13: #{spectral_conv2d_fast.1} parent=0 // pred_fallthru
    _
  // Predicated region
  $region14: #{spectral_conv2d_fast.1} parent=0 // pred_check
    _
  $region15: #{spectral_conv2d_fast.1} parent=0 // pred_check_branch
    %377 = sbr.rel (0) target = $region17
  $region16: #{spectral_conv2d_fast.1} parent=0 // pred_region
    _
  $region17: #{spectral_conv2d_fast.1} parent=0 // pred_fallthru
    _

</llo_original>
